<compile_context>
chip_gen: v7x
topology: tpu7x:2x2x1
jax: 0.10.0
libtpu: 0.0.40
codegen_flags: <defaults>
</compile_context>

<pallas_src>
import jax
import jax.numpy as jnp
from jax.experimental import pallas as pl
from jax.experimental.pallas import tpu as pltpu

_SCALE = 12.6572
_INV_SCALE = 1.0 / _SCALE
_LANES = 128
_TARGET_BLOCK_BYTES = 4 * 1024 * 1024   # ~4 MiB per input block (roofline plateau)
_VMEM_LIMIT_BYTES = 32 * 1024 * 1024    # 2 in x 2 buf x 4 MiB + temporaries, all chips


def _round_up(x, m):
    return ((x + m - 1) // m) * m


def _detect_num_tensorcores():
    """Best-effort TensorCores-per-chip (1 on v5e/v6e, 2 on v7x); None if unknown."""
    info = None
    try:
        info = pltpu.get_tpu_info()
    except Exception:
        info = None
    if info is not None:
        for name in ("num_cores", "core_count", "num_tensorcores",
                     "tensorcore_count", "num_cores_per_chip", "cores_per_chip"):
            v = getattr(info, name, None)
            if isinstance(v, int) and v >= 1:
                return v
    try:
        v = getattr(jax.devices()[0], "num_cores", None)
        if isinstance(v, int) and v >= 1:
            return v
    except Exception:
        pass
    return None


def _make_kernel(rows, tile_rows, blocks_per_split, total_blocks, has_pad_blocks):
    """Builds the kernel body; all arguments are static Python values."""
    has_tail = (rows % tile_rows) != 0

    def _accumulate(out_ref, vals):
        # Pure-VPU partial accumulation into the resident (8, 128) out block.
        out_ref[...] += jnp.sum(vals.reshape(-1, 8, _LANES), axis=0)

    def kernel(yt_ref, yp_ref, out_ref):
        s = pl.program_id(0)   # parallel split (TensorCore) axis
        i = pl.program_id(1)   # sequential reduction axis

        @pl.when(i == 0)
        def _():
            out_ref[...] = jnp.zeros_like(out_ref)

        yt = yt_ref[...].astype(jnp.float32)
        yp = yp_ref[...].astype(jnp.float32)

        inv = jnp.float32(_INV_SCALE)
        a = 1.0 + yt * inv                     # 1 + y_true / SCALE
        b = 1.0 + yp * inv                     # 1 + y_pred / SCALE
        ab = a * b
        r0 = pl.reciprocal(ab, approx=True)    # EUP slot (otherwise idle)
        r = r0 * (2.0 - ab * r0)               # one Newton step -> ~f32 exact
        # |1/a - 1/b| == |(yp - yt) * (1/(a*b))| * inv.  abs AFTER the product
        # keeps the identity correct when a*b < 0 (an input <= -SCALE).
        diff = jnp.abs((yp - yt) * r) * inv

        blk = s * blocks_per_split + i

        if has_tail:
            # Interior blocks: plain accumulate, zero mask work in the hot loop.
            @pl.when(blk < total_blocks - 1)
            def _():
                _accumulate(out_ref, diff)

            # Only the last real block pays for the ragged-tail mask.  Clamped
            # duplicate blocks (blk >= total_blocks) hit neither branch.
            @pl.when(blk == total_blocks - 1)
            def _():
                row_ids = blk * tile_rows + jax.lax.broadcasted_iota(
                    jnp.int32, diff.shape, 0)
                _accumulate(out_ref, jnp.where(row_ids < rows, diff, 0.0))
        elif has_pad_blocks:
            # Clamped duplicate blocks re-read the last block's data; skip them
            # so nothing is ever double-counted.
            @pl.when(blk < total_blocks)
            def _():
                _accumulate(out_ref, diff)
        else:
            _accumulate(out_ref, diff)

    return kernel


def distort_loss(y_true, y_pred):
    """Pallas implementation of DistortLoss.forward.  Returns a scalar f32."""
    assert y_true.shape == y_pred.shape, "y_true / y_pred must match"

    n = int(y_true.size)
    yt = y_true.reshape(-1)
    yp = y_pred.reshape(-1)

    # Lane-align only when necessary.  Zero padding contributes
    # |1/(1+0) - 1/(1+0)| = 0.  Image-like tensors are normally already a
    # multiple of 128, in which case this is a free reshape (no HBM copy).
    if n % _LANES != 0:
        pad = _LANES - n % _LANES
        yt = jnp.pad(yt, (0, pad))
        yp = jnp.pad(yp, (0, pad))

    rows = (n + _LANES - 1) // _LANES
    yt = yt.reshape(rows, _LANES)
    yp = yp.reshape(rows, _LANES)

    # Dtype-aware block: ~4 MiB per input per buffer (8192 rows f32, 16384 bf16),
    # shrunk for small inputs so the tiny case is a single-block dispatch.
    itemsize = max(y_true.dtype.itemsize, y_pred.dtype.itemsize)
    max_tile_rows = max(8, (_TARGET_BLOCK_BYTES // (_LANES * itemsize)) // 8 * 8)
    tile_rows = min(max_tile_rows, _round_up(rows, 8))
    total_blocks = -(-rows // tile_rows)

    # Split the block stream across TensorCores only when the chip has more
    # than one; on 1-TC chips n_splits == 1 keeps the hot loop clamp/mask-free.
    detected_cores = _detect_num_tensorcores()
    if detected_cores is None:
        # Unknown hardware: a 2-way split costs one skipped clamped block on a
        # 1-TC chip but preserves the up-to-2x HBM-bandwidth win on a 2-TC chip.
        n_splits = 2 if total_blocks >= 2 else 1
        use_core_parallel = False
    else:
        n_splits = max(1, min(detected_cores, total_blocks))
        use_core_parallel = detected_cores >= 2 and n_splits == detected_cores
    blocks_per_split = -(-total_blocks // n_splits)
    has_pad_blocks = n_splits * blocks_per_split > total_blocks

    if has_pad_blocks:
        # Trailing logical block(s) are out of range: clamp the DMA index; the
        # kernel skips their accumulation via `blk < total_blocks`.
        def in_index(s, i):
            return (jnp.minimum(s * blocks_per_split + i, total_blocks - 1), 0)
    else:
        def in_index(s, i):
            return (s * blocks_per_split + i, 0)

    kernel = _make_kernel(rows, tile_rows, blocks_per_split, total_blocks,
                          has_pad_blocks)

    # "parallel" shards the leading axis across TCs; when two cores are
    # positively detected, CORE_PARALLEL guarantees it.  (On v7x, sweep
    # pipeline_mode=pl.Buffered(3) with a trace if DMA waits are exposed.)
    lead_sem = pltpu.CORE_PARALLEL if use_core_parallel else pltpu.PARALLEL

    out_rows = n_splits * 8
    in_bytes = n * (y_true.dtype.itemsize + y_pred.dtype.itemsize)

    out = pl.pallas_call(
        kernel,
        out_shape=jax.ShapeDtypeStruct((out_rows, _LANES), jnp.float32),
        grid_spec=pltpu.PrefetchScalarGridSpec(
            num_scalar_prefetch=0,
            grid=(n_splits, blocks_per_split),
            in_specs=[
                pl.BlockSpec((tile_rows, _LANES), in_index),
                pl.BlockSpec((tile_rows, _LANES), in_index),
            ],
            # Per-split resident accumulator block ("arbitrary" inner axis).
            out_specs=pl.BlockSpec((8, _LANES), lambda s, i: (s, 0)),
        ),
        compiler_params=pltpu.CompilerParams(
            dimension_semantics=(lead_sem, pltpu.ARBITRARY),
            vmem_limit_bytes=_VMEM_LIMIT_BYTES,
        ),
        cost_estimate=pl.CostEstimate(
            flops=14 * n,
            transcendentals=n,
            bytes_accessed=in_bytes + out_rows * _LANES * 4,
        ),
    )(yt, yp)

    # Tiny final cross-lane reduction of the per-split partial slabs.
    return jnp.sum(out)


def _reference(y_true, y_pred):
    true = 1.0 / (1.0 + y_true / _SCALE)
    pred = 1.0 / (1.0 + y_pred / _SCALE)
    return jnp.sum(jnp.abs(true - pred))


if __name__ == "__main__":
    key = jax.random.PRNGKey(0)
    k1, k2, k3, k4 = jax.random.split(key, 4)

    # Lane-aligned image-like inputs (NCHW).
    y_true = jax.random.uniform(k1, (2, 4, 16, 16), dtype=jnp.float32) * 10.0
    y_pred = jax.random.uniform(k2, (2, 4, 16, 16), dtype=jnp.float32) * 10.0
    loss = distort_loss(y_true, y_pred)
    jax.block_until_ready(loss)
    ref = _reference(y_true, y_pred)
    assert jnp.allclose(loss, ref, rtol=1e-3, atol=1e-5), (loss, ref)

    # Non-lane-aligned shape with negative values: exercises the ragged-tail
    # mask branch and the sign-safe |.| placement (values below -12.6572).
    y_true2 = jax.random.uniform(k3, (3, 5, 17, 19), dtype=jnp.float32,
                                 minval=-20.0, maxval=20.0)
    y_pred2 = jax.random.uniform(k4, (3, 5, 17, 19), dtype=jnp.float32,
                                 minval=0.0, maxval=10.0)
    loss2 = distort_loss(y_true2, y_pred2)
    jax.block_until_ready(loss2)
    ref2 = _reference(y_true2, y_pred2)
    assert jnp.allclose(loss2, ref2, rtol=1e-3, atol=1e-4), (loss2, ref2)

    print("KERNEL_OK")
</pallas_src>

<mosaic_0001>
module attributes {stable_mosaic.version = 11 : i64} {
  func.func @kernel(%arg0: i32, %arg1: i32, %arg2: memref<16x128xf32, #tpu.memory_space<vmem>>, %arg3: memref<16x128xf32, #tpu.memory_space<vmem>>, %arg4: memref<8x128xf32, #tpu.memory_space<vmem>>) attributes {dimension_semantics = [#tpu.dimension_semantics<parallel>, #tpu.dimension_semantics<arbitrary>], iteration_bounds = array<i64: 1, 1>, scalar_prefetch = 0 : i64, scratch_operands = 0 : i64, tpu.core_type = #tpu.core_type<tc>, window_params = [{transform_indices = @transform_0, window_bounds = array<i64: 16, 128>}, {transform_indices = @transform_1, window_bounds = array<i64: 16, 128>}, {transform_indices = @transform_2, window_bounds = array<i64: 8, 128>}]} {
    %c0_i32 = arith.constant 0 : i32
    %0 = arith.cmpi eq, %arg1, %c0_i32 : i32
    %1 = arith.extui %0 : i1 to i32
    %c0_i32_0 = arith.constant 0 : i32
    %2 = arith.cmpi ne, %1, %c0_i32_0 : i32
    scf.if %2 {
      %cst_14 = arith.constant 0.000000e+00 : f32
      %29 = vector.broadcast %cst_14 : f32 to vector<8x128xf32>
      %c0_15 = arith.constant 0 : index
      %c0_16 = arith.constant 0 : index
      %30 = vector.load %arg4[%c0_15, %c0_16] : memref<8x128xf32, #tpu.memory_space<vmem>>, vector<8x128xf32>
      tpu.vector_store %arg4[%c0_15, %c0_16], %29 {strides = array<i32>} : memref<8x128xf32, #tpu.memory_space<vmem>>, vector<8x128xf32>,
    } else {
    }
    %c0 = arith.constant 0 : index
    %c0_1 = arith.constant 0 : index
    %3 = vector.load %arg2[%c0, %c0_1] : memref<16x128xf32, #tpu.memory_space<vmem>>, vector<16x128xf32>
    %c0_2 = arith.constant 0 : index
    %c0_3 = arith.constant 0 : index
    %4 = vector.load %arg3[%c0_2, %c0_3] : memref<16x128xf32, #tpu.memory_space<vmem>>, vector<16x128xf32>
    %cst = arith.constant 0.0790064186 : f32
    %5 = vector.broadcast %cst : f32 to vector<16x128xf32>
    %6 = arith.mulf %3, %5 : vector<16x128xf32>
    %cst_4 = arith.constant 1.000000e+00 : f32
    %7 = vector.broadcast %cst_4 : f32 to vector<16x128xf32>
    %8 = arith.addf %7, %6 : vector<16x128xf32>
    %cst_5 = arith.constant 0.0790064186 : f32
    %9 = vector.broadcast %cst_5 : f32 to vector<16x128xf32>
    %10 = arith.mulf %4, %9 : vector<16x128xf32>
    %cst_6 = arith.constant 1.000000e+00 : f32
    %11 = vector.broadcast %cst_6 : f32 to vector<16x128xf32>
    %12 = arith.addf %11, %10 : vector<16x128xf32>
    %13 = arith.mulf %8, %12 : vector<16x128xf32>
    %14 = tpu.reciprocal %13 {approx = true} : vector<16x128xf32> -> vector<16x128xf32>
    %15 = arith.mulf %13, %14 : vector<16x128xf32>
    %cst_7 = arith.constant 2.000000e+00 : f32
    %16 = vector.broadcast %cst_7 : f32 to vector<16x128xf32>
    %17 = arith.subf %16, %15 : vector<16x128xf32>
    %18 = arith.mulf %14, %17 : vector<16x128xf32>
    %19 = arith.subf %4, %3 : vector<16x128xf32>
    %20 = arith.mulf %19, %18 : vector<16x128xf32>
    %21 = math.absf %20 : vector<16x128xf32>
    %cst_8 = arith.constant 0.0790064186 : f32
    %22 = vector.broadcast %cst_8 : f32 to vector<16x128xf32>
    %23 = arith.mulf %21, %22 : vector<16x128xf32>
    %c0_9 = arith.constant 0 : index
    %c0_10 = arith.constant 0 : index
    %24 = vector.load %arg4[%c0_9, %c0_10] : memref<8x128xf32, #tpu.memory_space<vmem>>, vector<8x128xf32>
    %25 = vector.shape_cast %23 : vector<16x128xf32> to vector<2x8x128xf32>
    %cst_11 = arith.constant dense<0.000000e+00> : vector<8x128xf32>
    %26 = vector.multi_reduction <add>, %25, %cst_11 [0] : vector<2x8x128xf32> to vector<8x128xf32>
    %27 = arith.addf %24, %26 : vector<8x128xf32>
    %c0_12 = arith.constant 0 : index
    %c0_13 = arith.constant 0 : index
    %28 = vector.load %arg4[%c0_12, %c0_13] : memref<8x128xf32, #tpu.memory_space<vmem>>, vector<8x128xf32>
    tpu.vector_store %arg4[%c0_12, %c0_13], %27 {strides = array<i32>} : memref<8x128xf32, #tpu.memory_space<vmem>>, vector<8x128xf32>,
    return
  }
  func.func @transform_0(%arg0: i32, %arg1: i32) -> (i32, i32) {
    %c1_i32 = arith.constant 1 : i32
    %0 = arith.muli %arg0, %c1_i32 : i32
    %1 = arith.addi %0, %arg1 : i32
    %c0_i32 = arith.constant 0 : i32
    %c0_i32_0 = arith.constant 0 : i32
    return %1, %c0_i32 : i32, i32
  }
  func.func @transform_1(%arg0: i32, %arg1: i32) -> (i32, i32) {
    %c1_i32 = arith.constant 1 : i32
    %0 = arith.muli %arg0, %c1_i32 : i32
    %1 = arith.addi %0, %arg1 : i32
    %c0_i32 = arith.constant 0 : i32
    %c0_i32_0 = arith.constant 0 : i32
    return %1, %c0_i32 : i32, i32
  }
  func.func @transform_2(%arg0: i32, %arg1: i32) -> (i32, i32) {
    %c0_i32 = arith.constant 0 : i32
    %c0_i32_0 = arith.constant 0 : i32
    return %arg0, %c0_i32 : i32, i32
  }
}

</mosaic_0001>

<llo_original>
// kernel: tpu_custom_call.1
$region0: #{tpu_custom_call.1}
  #allocation0 [shape = 'u32[]', space=smem, size = 0x4, offset = 0x4, fixed_abs, tag = 'smem constant byte address 0x4 - core index']
  #allocation1 [shape = 'u32[144,128]{1,0:T(1,128)}', space=vmem, size = 0x12000, scoped, tag = 'internal scratch']
  %s0 = inlined_call_operand.hbm [shape: f32[16,128], index: 0, kind: input, shape index: {}]
  %s1 = inlined_call_operand.hbm [shape: f32[16,128], index: 1, kind: input, shape index: {}]
  %s2 = inlined_call_operand.hbm [shape: f32[8,128], index: 2, kind: output, shape index: {}]
  %s3 = sld [smem:[#allocation0]]
  $region30: #{tpu_custom_call.1} parent=0
    _
  %s5 = ssub.s32 1, %s3
  %s6 = scalar_select 0, %s5, %s3
  $region1: #{tpu_custom_call.1} parent=0
    #allocation2 [shape = 'u8[8192]{0}', space=vmem, size = 0x2000, scoped, tag = 'input window, operand 0, single buffered']
    #allocation3 [shape = 's32[1]{0}', space=sflag, size = 0x4, scoped, tag = 'scoped memory for tpu_custom_call.1']
    #allocation4 [shape = 's32[1]{0}', space=sflag, size = 0x4, scoped, tag = 'scoped memory for tpu_custom_call.1']
    #allocation5 [shape = 'u8[8192]{0}', space=vmem, size = 0x2000, scoped, tag = 'input window, operand 1, single buffered']
    #allocation6 [shape = 's32[1]{0}', space=sflag, size = 0x4, scoped, tag = 'scoped memory for tpu_custom_call.1']
    #allocation7 [shape = 'u8[4096]{0}', space=vmem, size = 0x1000, scoped, tag = 'output window, operand 0, single buffered']
    %7 = vsyncpa [#allocation3], 0
    %8 = vsyncpa [#allocation6], 0
    %9 = vsyncpa [#allocation4], 0
    // Predicated region
    $region2: #{tpu_custom_call.1} parent=1 // pred_check
      _
    $region3: #{tpu_custom_call.1} parent=1 // pred_check_branch
      %11 = sbr.rel (0) target = $region5
    $region4: #{tpu_custom_call.1} parent=1 // pred_region
      %s12 = sadd.s32 0, 0
      %s13 = smul.u32 2, %s12
      %s15 = ssub.s32 256, 256
      %16 = vsyncadd [#allocation3], %s15
      %s17 = smul.addr %s13, 128
      %s18 = scalar_lea.hbm %s0, %s17
      %s19 = sshll.u32 [#allocation2], 4
      %s20 = int_to_ptr.vmem [resolvable:$true] %s19
      %25 = dma.hbm_to_vmem [thread:$0]  %s18, 256, %s20, [#allocation3], 128, 128, 8
    $region5: #{tpu_custom_call.1} parent=1 // pred_fallthru
      _
    // Predicated region
    $region6: #{tpu_custom_call.1} parent=1 // pred_check
      _
    $region7: #{tpu_custom_call.1} parent=1 // pred_check_branch
      %27 = sbr.rel (0) target = $region9
    $region8: #{tpu_custom_call.1} parent=1 // pred_region
      %s28 = sadd.s32 0, 0
      %s29 = smul.u32 2, %s28
      %s31 = ssub.s32 256, 256
      %32 = vsyncadd [#allocation6], %s31
      %s33 = smul.addr %s29, 128
      %s34 = scalar_lea.hbm %s1, %s33
      %s35 = sshll.u32 [#allocation5], 4
      %s36 = int_to_ptr.vmem [resolvable:$true] %s35
      %41 = dma.hbm_to_vmem [thread:$0]  %s34, 256, %s36, [#allocation6], 128, 128, 8
    $region9: #{tpu_custom_call.1} parent=1 // pred_fallthru
      _
    // Predicated region
    $region10: #{tpu_custom_call.1} parent=1 // pred_check
      _
    $region11: #{tpu_custom_call.1} parent=1 // pred_check_branch
      %43 = sbr.rel (0) target = $region13
    $region12: #{tpu_custom_call.1} parent=1 // pred_region
      %44 = dma.done [#allocation3], 256
    $region13: #{tpu_custom_call.1} parent=1 // pred_fallthru
      _
    // Predicated region
    $region14: #{tpu_custom_call.1} parent=1 // pred_check
      _
    $region15: #{tpu_custom_call.1} parent=1 // pred_check_branch
      %46 = sbr.rel (0) target = $region17
    $region16: #{tpu_custom_call.1} parent=1 // pred_region
      %47 = dma.done [#allocation6], 256
    $region17: #{tpu_custom_call.1} parent=1 // pred_fallthru
      _
    %s48 = sadd.s32 0, 0
    %s49 = smul.u32 2, %s48
    %s50 = sadd.s32 0, 0
    %s51 = smul.u32 2, %s50
    %p52 = scmp.eq.s32.totalorder 0, 0
    // Predicated region
    $region18: #{tpu_custom_call.1} parent=1 // pred_check
      %p53 = pneg %p52
    $region19: #{tpu_custom_call.1} parent=1 // pred_check_branch
      %55 = sbr.rel (%p53) target = $region21
    $region20: #{tpu_custom_call.1} parent=1 // pred_region
      %56 = vst [vmem:[#allocation7] sm:$0xff] 0.0
    $region21: #{tpu_custom_call.1} parent=1 // pred_fallthru
      _
    %v57 = vld [vmem:[#allocation2] sm:$0xff]
    %v58 = vld [vmem:[#allocation2 + $0x8] sm:$0xff]
    %v59 = vld [vmem:[#allocation5] sm:$0xff]
    %v60 = vld [vmem:[#allocation5 + $0x8] sm:$0xff]
    %v61 = vmul.f32 %v57, 0.07900642
    %v62 = vmul.f32 %v58, 0.07900642
    %v63 = vadd.f32 %v61, 1.0
    %v64 = vadd.f32 %v62, 1.0
    %v65 = vmul.f32 %v59, 0.07900642
    %v66 = vmul.f32 %v60, 0.07900642
    %v67 = vadd.f32 %v65, 1.0
    %v68 = vadd.f32 %v66, 1.0
    %v69 = vmul.f32 %v63, %v67
    %v70 = vmul.f32 %v64, %v68
    %v71 = vrcp.pop %v69
    %v72 = vrcp.pop %v70
    %v73 = vmul.f32 %v69, %v71
    %v74 = vmul.f32 %v70, %v72
    %v75 = vsub.f32 2.0, %v73
    %v76 = vsub.f32 2.0, %v74
    %v77 = vmul.f32 %v71, %v75
    %v78 = vmul.f32 %v72, %v76
    %v79 = vsub.f32 %v59, %v57
    %v80 = vsub.f32 %v60, %v58
    %v81 = vmul.f32 %v79, %v77
    %v82 = vmul.f32 %v80, %v78
    %v83 = vand.u32 2147483647, %v81
    %v84 = vand.u32 2147483647, %v82
    %v85 = vmul.f32 %v83, 0.07900642
    %v86 = vmul.f32 %v84, 0.07900642
    %v87 = vld [vmem:[#allocation7] sm:$0xff]
    %v88 = vadd.f32 %v85, %v86
    %v89 = vadd.f32 %v87, %v88
    %90 = vst [vmem:[#allocation7] sm:$0xff] %v89
    // Predicated region
    $region22: #{tpu_custom_call.1} parent=1 // pred_check
      _
    $region23: #{tpu_custom_call.1} parent=1 // pred_check_branch
      %92 = sbr.rel (0) target = $region25
    $region24: #{tpu_custom_call.1} parent=1 // pred_region
      %s94 = ssub.s32 128, 128
      %95 = vsyncadd [#allocation4], %s94
      %s97 = sshll.u32 [#allocation7], 4
      %s98 = int_to_ptr.vmem [resolvable:$true] %s97
      %100 = dma.vmem_to_hbm [thread:$0]  %s98, 128, %s2, [#allocation4]
    $region25: #{tpu_custom_call.1} parent=1 // pred_fallthru
      _
    // Predicated region
    $region26: #{tpu_custom_call.1} parent=1 // pred_check
      _
    $region27: #{tpu_custom_call.1} parent=1 // pred_check_branch
      %102 = sbr.rel (0) target = $region29
    $region28: #{tpu_custom_call.1} parent=1 // pred_region
      %103 = dma.done [#allocation4], 128
    $region29: #{tpu_custom_call.1} parent=1 // pred_fallthru
      _
    %104 = vsyncpa [#allocation3], 1
    %105 = vsyncpa [#allocation6], 1
    %106 = vsyncpa [#allocation4], 1

</llo_original>
